<compile_context>
chip_gen: v7x
topology: tpu7x:2x2x1
jax: 0.10.0
libtpu: 0.0.40
codegen_flags: <defaults>
</compile_context>

<pallas_src>
import functools

import jax
import jax.numpy as jnp
from jax.experimental import pallas as pl
from jax.experimental.pallas import tpu as pltpu


def _round_up(v, m):
    return ((v + m - 1) // m) * m


def _vmem_limit_bytes():
    """Generation-aware VMEM budget (v5e/v6e: 128 MiB physical, v7x: 64 MiB)."""
    try:
        cap = pltpu.get_tpu_info().vmem_capacity_bytes
        return int(min(64 * 1024 * 1024, 0.55 * cap))
    except Exception:
        return 48 * 1024 * 1024


# ---------------------------------------------------------------------------
# Kernels
# ---------------------------------------------------------------------------

def _xw_scale_kernel(x_ref, w_ref, dinv_ref, o_ref):
    """o = dinv_row * (x @ W1), written bf16 (pre-scaled z for propagation)."""
    xw = jnp.dot(x_ref[...], w_ref[...], preferred_element_type=jnp.float32)
    o_ref[...] = (dinv_ref[...] * xw).astype(o_ref.dtype)


def _propagate_accumulate(a_ref, z_ref, acc_ref, *, tile_k, z_resident):
    """acc += A_tile @ z_tile (bf16 x bf16 -> f32) for one (i, k) grid step."""
    k = pl.program_id(1)

    @pl.when(k == 0)
    def _init():
        acc_ref[...] = jnp.zeros_like(acc_ref)

    if z_resident:
        start = pl.multiple_of(k * tile_k, tile_k)
        z_blk = z_ref[pl.ds(start, tile_k), :]
    else:
        z_blk = z_ref[...]
    acc_ref[...] += jnp.dot(a_ref[...], z_blk,
                            preferred_element_type=jnp.float32)


def _prop_plain_kernel(a_ref, z_ref, dinv_ref, b_ref, o_ref, acc_ref,
                       *, tile_k, z_resident):
    """o = dinv_row * (A_hat @ z_scaled) + b."""
    _propagate_accumulate(a_ref, z_ref, acc_ref,
                          tile_k=tile_k, z_resident=z_resident)

    @pl.when(pl.program_id(1) == pl.num_programs(1) - 1)
    def _finalize():
        o_ref[...] = (dinv_ref[...] * acc_ref[...] + b_ref[...]).astype(o_ref.dtype)


def _prop_fused_w2_kernel(a_ref, z_ref, dinv_ref, b_ref, w2_ref, o_ref, acc_ref,
                          *, tile_k, z_resident):
    """Layer-1 propagate with the layer-2 feature matmul fused into finalize.

    h  = dinv_row * (A_hat @ z_scaled) + b1
    o  = dinv_row * (h @ W2)        (bf16; already pre-scaled z for layer 2)
    """
    _propagate_accumulate(a_ref, z_ref, acc_ref,
                          tile_k=tile_k, z_resident=z_resident)

    @pl.when(pl.program_id(1) == pl.num_programs(1) - 1)
    def _finalize():
        h = dinv_ref[...] * acc_ref[...] + b_ref[...]
        hw = jnp.dot(h, w2_ref[...], preferred_element_type=jnp.float32)
        o_ref[...] = (dinv_ref[...] * hw).astype(o_ref.dtype)


# ---------------------------------------------------------------------------
# Pallas wrappers
# ---------------------------------------------------------------------------

def _feature_transform_scaled(x, w, dinv_row, *, tile_m, vmem_limit):
    """bf16 z = dinv_row * (x @ W), row-tiled."""
    n_pad, f_in = x.shape
    f_out = w.shape[1]
    cost = pl.CostEstimate(
        flops=2 * n_pad * f_in * f_out + n_pad * f_out,
        transcendentals=0,
        bytes_accessed=4 * (n_pad * f_in + f_in * f_out + n_pad) + 2 * n_pad * f_out)
    return pl.pallas_call(
        _xw_scale_kernel,
        out_shape=jax.ShapeDtypeStruct((n_pad, f_out), jnp.bfloat16),
        grid=(n_pad // tile_m,),
        in_specs=[
            pl.BlockSpec((tile_m, f_in), lambda i: (i, 0)),
            pl.BlockSpec((f_in, f_out), lambda i: (0, 0)),
            pl.BlockSpec((tile_m, 1), lambda i: (i, 0)),
        ],
        out_specs=pl.BlockSpec((tile_m, f_out), lambda i: (i, 0)),
        compiler_params=pltpu.CompilerParams(
            dimension_semantics=("parallel",),
            vmem_limit_bytes=vmem_limit),
        cost_estimate=cost,
    )(x, w, dinv_row)


def _gcn_propagate(a_hat, z_scaled, dinv_row, bias, *, tile_m, tile_k,
                   w2=None, out_dtype=jnp.float32, vmem_limit=48 * 1024 * 1024):
    """out = dinv_row * (A_hat @ z_scaled) + bias, optionally fused with @ W2."""
    n_pad = a_hat.shape[0]
    f_in = z_scaled.shape[1]
    f_out = f_in if w2 is None else w2.shape[1]
    a_size = jnp.dtype(a_hat.dtype).itemsize
    z_size = jnp.dtype(z_scaled.dtype).itemsize
    o_size = jnp.dtype(out_dtype).itemsize

    # VMEM working-set check: keep z fully resident (single HBM load) if it fits.
    fixed = (2 * tile_m * tile_k * a_size                      # A double buffer
             + tile_m * f_in * 4                               # f32 accumulator
             + 2 * tile_m * f_out * o_size                     # output double buffer
             + (0 if w2 is None else int(w2.size) * jnp.dtype(w2.dtype).itemsize)
             + int(bias.size) * 4 + tile_m * 4)                # bias + dinv rows
    z_resident = fixed + n_pad * f_in * z_size <= int(0.8 * vmem_limit)

    if z_resident:
        z_spec = pl.BlockSpec((n_pad, f_in), lambda i, k: (0, 0))
        z_traffic = n_pad * f_in * z_size
    else:
        z_spec = pl.BlockSpec((tile_k, f_in), lambda i, k: (k, 0))
        z_traffic = (n_pad // tile_m) * n_pad * f_in * z_size

    flops = 2 * n_pad * n_pad * f_in + 2 * n_pad * f_in
    if w2 is not None:
        flops += 2 * n_pad * f_in * f_out + n_pad * f_out
    cost = pl.CostEstimate(
        flops=flops, transcendentals=0,
        bytes_accessed=(n_pad * n_pad * a_size + z_traffic
                        + n_pad * f_out * o_size + n_pad * 4 + int(bias.size) * 4
                        + (0 if w2 is None else int(w2.size) * 4)))

    in_specs = [
        pl.BlockSpec((tile_m, tile_k), lambda i, k: (i, k)),   # A_hat tile (bf16)
        z_spec,                                                # pre-scaled z (bf16)
        pl.BlockSpec((tile_m, 1), lambda i, k: (i, 0)),        # dinv rows
        pl.BlockSpec(bias.shape, lambda i, k: (0, 0)),         # bias (resident)
    ]
    args = [a_hat, z_scaled, dinv_row, bias]
    if w2 is None:
        kernel = functools.partial(_prop_plain_kernel,
                                   tile_k=tile_k, z_resident=z_resident)
    else:
        kernel = functools.partial(_prop_fused_w2_kernel,
                                   tile_k=tile_k, z_resident=z_resident)
        in_specs.append(pl.BlockSpec(w2.shape, lambda i, k: (0, 0)))  # W2 resident
        args.append(w2)

    return pl.pallas_call(
        kernel,
        out_shape=jax.ShapeDtypeStruct((n_pad, f_out), out_dtype),
        grid=(n_pad // tile_m, n_pad // tile_k),
        in_specs=in_specs,
        out_specs=pl.BlockSpec((tile_m, f_out), lambda i, k: (i, 0)),
        scratch_shapes=[pltpu.VMEM((tile_m, f_in), jnp.float32)],
        compiler_params=pltpu.CompilerParams(
            dimension_semantics=("parallel", "arbitrary"),
            vmem_limit_bytes=vmem_limit),
        cost_estimate=cost,
    )(*args)


# ---------------------------------------------------------------------------
# Model glue
# ---------------------------------------------------------------------------

def build_gcn_adjacency(edge_index, num_nodes, n_pad):
    """A_hat (bf16, zero-padded to n_pad) + D^{-1/2}, PyG gcn_norm semantics."""
    # TODO(synk): sparse edge_index -> dense adjacency scatter-add stays in JAX;
    # for large, genuinely sparse graphs a CSR SpMM (PrefetchScalarGridSpec row
    # pointers + manual z-row gathers) would avoid the dense O(N^2) stream.
    src = edge_index[0].astype(jnp.int32)
    dst = edge_index[1].astype(jnp.int32)
    # A_hat[i, j] = #edges j -> i (messages flow source -> target).
    a_hat = jnp.zeros((n_pad, n_pad), jnp.float32).at[dst, src].add(1.0)
    # add_remaining_self_loops: add a self loop only where one is not present.
    idx = jnp.arange(num_nodes, dtype=jnp.int32)
    diag = a_hat[idx, idx]
    a_hat = a_hat.at[idx, idx].set(jnp.where(diag > 0.0, diag, 1.0))
    deg = a_hat.sum(axis=1)
    dinv = jnp.where(deg > 0.0, jax.lax.rsqrt(deg), 0.0)
    # Edge counts are small integers -> exactly representable in bf16; halves
    # the dominant O(N^2) HBM stream and is the MXU's native input format.
    # TODO(synk): on v5e an int8 A_hat (cast to bf16 in-kernel) would quarter it.
    return a_hat.astype(jnp.bfloat16), dinv


def init_edge_predictor_params(key, in_channels, hidden_channels=64):
    """Glorot-uniform weights, zero biases (like GCNConv.reset_parameters)."""
    def glorot(k, fan_in, fan_out):
        limit = jnp.sqrt(6.0 / (fan_in + fan_out))
        return jax.random.uniform(k, (fan_in, fan_out), jnp.float32,
                                  minval=-limit, maxval=limit)
    k1, k2, k3 = jax.random.split(key, 3)
    w1 = glorot(k1, in_channels, hidden_channels)
    b1 = jnp.zeros((hidden_channels,), jnp.float32)
    wmu = glorot(k2, hidden_channels, in_channels)
    bmu = jnp.zeros((in_channels,), jnp.float32)
    wls = glorot(k3, hidden_channels, in_channels)
    bls = jnp.zeros((in_channels,), jnp.float32)
    return (w1, b1, wmu, bmu, wls, bls)


def edge_predictor_forward(x, edge_index, params):
    w1, b1, wmu, bmu, wls, bls = params
    n, in_c = x.shape
    hidden = w1.shape[1]

    c_pad = _round_up(in_c, 128)
    h_pad = _round_up(hidden, 128)
    # Pad N to a multiple of 512 so the contraction tile is always 512-wide
    # (small tiles sit well below the HBM roofline: ~0.35 us/step overhead).
    n_pad = _round_up(n, 512)
    tile_k = 512
    # Keep >= 2 row tiles so the "parallel" axis can be sharded across both
    # TensorCores on v7x; costs nothing on single-TC v5e/v6e.
    tile_m = 512 if n_pad >= 1024 else 256

    vmem_limit = _vmem_limit_bytes()

    # Lane-dense padding of features + fused mu|logstd weights / biases.
    x_p = jnp.zeros((n_pad, c_pad), jnp.float32).at[:n, :in_c].set(x)
    w1_p = jnp.zeros((c_pad, h_pad), jnp.float32).at[:in_c, :hidden].set(w1)
    b1_p = jnp.zeros((1, h_pad), jnp.float32).at[0, :hidden].set(b1)
    w2_p = jnp.zeros((h_pad, 2 * c_pad), jnp.float32)
    w2_p = w2_p.at[:hidden, :in_c].set(wmu)
    w2_p = w2_p.at[:hidden, c_pad:c_pad + in_c].set(wls)
    b2_p = jnp.zeros((1, 2 * c_pad), jnp.float32)
    b2_p = b2_p.at[0, :in_c].set(bmu)
    b2_p = b2_p.at[0, c_pad:c_pad + in_c].set(bls)

    a_hat, dinv = build_gcn_adjacency(edge_index, n, n_pad)
    dinv_row = dinv.reshape(n_pad, 1)

    # z1 = dinv * (x @ W1), bf16 (normalization folded into the column scaling).
    z1 = _feature_transform_scaled(x_p, w1_p, dinv_row,
                                   tile_m=tile_m, vmem_limit=vmem_limit)

    # Pass 1 (layer 1 + fused layer-2 feature matmul):
    #   h  = dinv_r * (A_hat @ z1) + b1
    #   z2 = dinv_r * (h @ [Wmu|Wls])          (written bf16, no h HBM round trip)
    z2 = _gcn_propagate(a_hat, z1, dinv_row, b1_p,
                        tile_m=tile_m, tile_k=tile_k,
                        w2=w2_p, out_dtype=jnp.bfloat16, vmem_limit=vmem_limit)

    # Pass 2 (fused mu|logstd): out = dinv_r * (A_hat @ z2) + [bmu|bls]
    out = _gcn_propagate(a_hat, z2, dinv_row, b2_p,
                         tile_m=tile_m, tile_k=tile_k,
                         out_dtype=jnp.float32, vmem_limit=vmem_limit)

    m = out[:n, :in_c]
    s = out[:n, c_pad:c_pad + in_c]
    return m, s


def _reference_forward(x, edge_index, params):
    """Pure-JAX f32 reference (same math, un-padded) for a sanity check."""
    n = x.shape[0]
    src, dst = edge_index[0], edge_index[1]
    a_hat = jnp.zeros((n, n), jnp.float32).at[dst, src].add(1.0)
    idx = jnp.arange(n)
    diag = a_hat[idx, idx]
    a_hat = a_hat.at[idx, idx].set(jnp.where(diag > 0.0, diag, 1.0))
    deg = a_hat.sum(axis=1)
    dinv = jnp.where(deg > 0.0, jax.lax.rsqrt(deg), 0.0)
    adj = dinv[:, None] * a_hat * dinv[None, :]
    w1, b1, wmu, bmu, wls, bls = params
    h = adj @ (x @ w1) + b1
    m = adj @ (h @ wmu) + bmu
    s = adj @ (h @ wls) + bls
    return m, s


if __name__ == "__main__":
    key = jax.random.PRNGKey(0)
    k_x, k_e, k_p = jax.random.split(key, 3)

    num_nodes = 16
    in_channels = 8
    hidden_channels = 32
    num_edges = 24

    x = jax.random.normal(k_x, (num_nodes, in_channels), jnp.float32)
    edge_index = jax.random.randint(
        k_e, (2, num_edges), minval=0, maxval=num_nodes, dtype=jnp.int32)
    # Add one explicit self loop to exercise add_remaining_self_loops semantics.
    edge_index = jnp.concatenate(
        [edge_index, jnp.array([[5], [5]], dtype=jnp.int32)], axis=1)

    params = init_edge_predictor_params(k_p, in_channels, hidden_channels)

    m, s = edge_predictor_forward(x, edge_index, params)
    jax.block_until_ready((m, s))

    m_ref, s_ref = _reference_forward(x, edge_index, params)
    assert m.shape == (num_nodes, in_channels)
    assert s.shape == (num_nodes, in_channels)
    # bf16 adjacency (exact) + bf16 z streams -> slightly looser tolerance.
    assert jnp.allclose(m, m_ref, atol=3e-2, rtol=3e-2), \
        float(jnp.max(jnp.abs(m - m_ref)))
    assert jnp.allclose(s, s_ref, atol=3e-2, rtol=3e-2), \
        float(jnp.max(jnp.abs(s - s_ref)))

    print("KERNEL_OK")
</pallas_src>

<mosaic_0001>
module attributes {stable_mosaic.version = 11 : i64} {
  func.func @_xw_scale_kernel(%arg0: i32, %arg1: memref<256x128xf32, #tpu.memory_space<vmem>>, %arg2: memref<128x128xf32, #tpu.memory_space<vmem>>, %arg3: memref<256x1xf32, #tpu.memory_space<vmem>>, %arg4: memref<256x128xbf16, #tpu.memory_space<vmem>>) attributes {dimension_semantics = [#tpu.dimension_semantics<parallel>], iteration_bounds = array<i64: 2>, scalar_prefetch = 0 : i64, scratch_operands = 0 : i64, tpu.core_type = #tpu.core_type<tc>, window_params = [{transform_indices = @transform_0, window_bounds = array<i64: 256, 128>}, {pipeline_mode = #tpu.pipeline_mode<synchronous>, transform_indices = @transform_1, window_bounds = array<i64: 128, 128>}, {transform_indices = @transform_2, window_bounds = array<i64: 256, 1>}, {transform_indices = @transform_3, window_bounds = array<i64: 256, 128>}]} {
    %c0 = arith.constant 0 : index
    %c0_0 = arith.constant 0 : index
    %0 = vector.load %arg1[%c0, %c0_0] : memref<256x128xf32, #tpu.memory_space<vmem>>, vector<256x128xf32>
    %c0_1 = arith.constant 0 : index
    %c0_2 = arith.constant 0 : index
    %1 = vector.load %arg2[%c0_1, %c0_2] : memref<128x128xf32, #tpu.memory_space<vmem>>, vector<128x128xf32>
    %cst = arith.constant dense<0.000000e+00> : vector<256x128xf32>
    %2 = tpu.matmul %0, %1, %cst {dimension_numbers = #tpu.dot_dimension_numbers<[1], [0], [0], [1], [0, 0, 1, 1], [], []>} : vector<256x128xf32>, vector<128x128xf32>, vector<256x128xf32> -> vector<256x128xf32>
    %c0_3 = arith.constant 0 : index
    %c0_4 = arith.constant 0 : index
    %3 = vector.load %arg3[%c0_3, %c0_4] : memref<256x1xf32, #tpu.memory_space<vmem>>, vector<256x1xf32>
    %4 = vector.broadcast %3 : vector<256x1xf32> to vector<256x128xf32>
    %5 = arith.mulf %4, %2 : vector<256x128xf32>
    %6 = arith.truncf %5 : vector<256x128xf32> to vector<256x128xbf16>
    %c0_5 = arith.constant 0 : index
    %c0_6 = arith.constant 0 : index
    %7 = vector.load %arg4[%c0_5, %c0_6] : memref<256x128xbf16, #tpu.memory_space<vmem>>, vector<256x128xbf16>
    tpu.vector_store %arg4[%c0_5, %c0_6], %6 {strides = array<i32>} : memref<256x128xbf16, #tpu.memory_space<vmem>>, vector<256x128xbf16>,
    return
  }
  func.func @transform_0(%arg0: i32) -> (i32, i32) {
    %c0_i32 = arith.constant 0 : i32
    %c0_i32_0 = arith.constant 0 : i32
    return %arg0, %c0_i32 : i32, i32
  }
  func.func @transform_1(%arg0: i32) -> (i32, i32) {
    %c0_i32 = arith.constant 0 : i32
    %c0_i32_0 = arith.constant 0 : i32
    %c0_i32_1 = arith.constant 0 : i32
    return %c0_i32, %c0_i32_0 : i32, i32
  }
  func.func @transform_2(%arg0: i32) -> (i32, i32) {
    %c0_i32 = arith.constant 0 : i32
    %c0_i32_0 = arith.constant 0 : i32
    return %arg0, %c0_i32 : i32, i32
  }
  func.func @transform_3(%arg0: i32) -> (i32, i32) {
    %c0_i32 = arith.constant 0 : i32
    %c0_i32_0 = arith.constant 0 : i32
    return %arg0, %c0_i32 : i32, i32
  }
}

</mosaic_0001>

<llo_original>
// kernel: tpu_custom_call.1
$region0: #{tpu_custom_call.1}
  #allocation0 [shape = 'u32[]', space=smem, size = 0x4, offset = 0x4, fixed_abs, tag = 'smem constant byte address 0x4 - core index']
  #allocation1 [shape = 'u32[144,128]{1,0:T(1,128)}', space=vmem, size = 0x12000, scoped, tag = 'internal scratch']
  %s0 = inlined_call_operand.vmem [shape: f32[512,128], index: 0, kind: input, shape index: {}]
  %s1 = inlined_call_operand.hbm [shape: f32[128,128], index: 1, kind: input, shape index: {}]
  %s2 = inlined_call_operand.vmem [shape: f32[512,1], index: 2, kind: input, shape index: {}]
  %s3 = inlined_call_operand.hbm [shape: bf16[512,128], index: 3, kind: output, shape index: {}]
  %s4 = sld [smem:[#allocation0]]
  $region49: #{tpu_custom_call.1} parent=0
    _
  %s6 = ssub.s32 1, %s4
  %s7 = scalar_select 0, %s6, %s4
  $region1: #{tpu_custom_call.1} parent=0
    #allocation2 [shape = 'u8[65536]{0}', space=vmem, size = 0x10000, scoped, tag = 'input window, operand 1, single buffered']
    #allocation3 [shape = 's32[2]{0}', space=sflag, size = 0x8, scoped, tag = 'scoped memory for tpu_custom_call.1']
    #allocation4 [shape = 's32[2]{0}', space=sflag, size = 0x8, scoped, tag = 'scoped memory for tpu_custom_call.1']
    #allocation5 [shape = 'u8[131072]{0}', space=vmem, size = 0x20000, scoped, tag = 'output window, operand 0']
    %8 = vsyncpa [#allocation3], 0
    %9 = vsyncpa [#allocation4], 0
    %s10 = scalar_lea.sflag [#allocation4], 1
    %11 = vsyncpa %s10, 0
    loop: start=0, step=1, limit=4
    $region2: #{tpu_custom_call.1} parent=1 // loop_pre_header
      _
    $region3: #{tpu_custom_call.1} parent=1 // loop_header
      %s13 = sphi 0, %s17
      %p14 = scmp.ge.s32.totalorder %s13, 4
      %s23 = sphi 0, %s25
      %s26 = sphi 0, %s23
      %s27 = sphi 0, %s26
      %s43 = sphi 0, %s27
      %s47 = sphi 0, %s47
      %s49 = sphi 0, %s47
      %s50 = sphi 0, %s49
      %s64 = sphi 0, %s50
      %s70 = sphi 0, %s72
      %s73 = sphi 0, %s70
      %s74 = sphi 0, %s73
      %s90 = sphi 0, %s74
      %s96 = sphi 0, %s98
      %s99 = sphi 0, %s96
      %s100 = sphi 0, %s99
      %s116 = sphi 0, %s100
    $region4: #{tpu_custom_call.1} parent=1 // loop_header_branch
      %16 = sbr.rel (%p14) target = $region8
    $region5: #{tpu_custom_call.1} parent=1 // loop_body
      %s18 = ssub.s32 %s13, 1
      %s19 = ssub.s32 %s13, 2
      %s20 = sadd.s32 %s13, 1
      %s21 = ssub.s32 %s13, %s20
      %p22 = scmp.eq.s32.totalorder %s21, 0
      %s24 = sadd.s32 %s23, 1
      %s25 = scalar_select %p22, %s23, %s24
      %p28 = pneg %p22
      %p29 = scmp.eq.s32.totalorder %s13, 1
      %p30 = por %p28, %p29
      %p31 = scmp.ne.s32.totalorder %s23, %s26
      %p32 = scmp.eq.s32.totalorder %s13, 0
      %p33 = por %p31, %p32
      %p34 = scmp.ne.s32.totalorder %s23, %s26
      %p35 = scmp.eq.s32.totalorder %s18, 1
      %p36 = por %p34, %p35
      %p37 = scmp.ne.s32.totalorder %s26, %s27
      %p38 = scmp.eq.s32.totalorder %s18, 0
      %p39 = por %p37, %p38
      %p40 = scmp.ne.s32.totalorder %s26, %s27
      %p41 = scmp.eq.s32.totalorder %s19, 1
      %p42 = por %p40, %p41
      %p44 = scmp.ne.s32.totalorder %s27, %s43
      %p45 = scmp.eq.s32.totalorder %s19, 0
      %p46 = por %p44, %p45
      %s48 = sadd.s32 %s47, 1
      %p51 = scmp.eq.s32.totalorder %s13, 1
      %p52 = scmp.ne.s32.totalorder %s47, %s49
      %p53 = scmp.eq.s32.totalorder %s13, 0
      %p54 = por %p52, %p53
      %p55 = scmp.ne.s32.totalorder %s47, %s49
      %p56 = scmp.eq.s32.totalorder %s18, 1
      %p57 = por %p55, %p56
      %p58 = scmp.ne.s32.totalorder %s49, %s50
      %p59 = scmp.eq.s32.totalorder %s18, 0
      %p60 = por %p58, %p59
      %p61 = scmp.ne.s32.totalorder %s49, %s50
      %p62 = scmp.eq.s32.totalorder %s19, 1
      %p63 = por %p61, %p62
      %p65 = scmp.ne.s32.totalorder %s50, %s64
      %p66 = scmp.eq.s32.totalorder %s19, 0
      %p67 = por %p65, %p66
      %s68 = ssub.s32 %s13, %s20
      %p69 = scmp.eq.s32.totalorder %s68, 0
      %s71 = sadd.s32 %s70, 1
      %s72 = scalar_select %p69, %s70, %s71
      %p75 = pneg %p69
      %p76 = scmp.eq.s32.totalorder %s13, 1
      %p77 = por %p75, %p76
      %p78 = scmp.ne.s32.totalorder %s70, %s73
      %p79 = scmp.eq.s32.totalorder %s13, 0
      %p80 = por %p78, %p79
      %p81 = scmp.ne.s32.totalorder %s70, %s73
      %p82 = scmp.eq.s32.totalorder %s18, 1
      %p83 = por %p81, %p82
      %p84 = scmp.ne.s32.totalorder %s73, %s74
      %p85 = scmp.eq.s32.totalorder %s18, 0
      %p86 = por %p84, %p85
      %p87 = scmp.ne.s32.totalorder %s73, %s74
      %p88 = scmp.eq.s32.totalorder %s19, 1
      %p89 = por %p87, %p88
      %p91 = scmp.ne.s32.totalorder %s74, %s90
      %p92 = scmp.eq.s32.totalorder %s19, 0
      %p93 = por %p91, %p92
      %s94 = ssub.s32 %s13, %s20
      %p95 = scmp.eq.s32.totalorder %s94, 0
      %s97 = sadd.s32 %s96, 1
      %s98 = scalar_select %p95, %s96, %s97
      %p101 = pneg %p95
      %p102 = scmp.eq.s32.totalorder %s13, 1
      %p103 = por %p101, %p102
      %p104 = scmp.ne.s32.totalorder %s96, %s99
      %p105 = scmp.eq.s32.totalorder %s13, 0
      %p106 = por %p104, %p105
      %p107 = scmp.ne.s32.totalorder %s96, %s99
      %p108 = scmp.eq.s32.totalorder %s18, 1
      %p109 = por %p107, %p108
      %p110 = scmp.ne.s32.totalorder %s99, %s100
      %p111 = scmp.eq.s32.totalorder %s18, 0
      %p112 = por %p110, %p111
      %p113 = scmp.ne.s32.totalorder %s99, %s100
      %p114 = scmp.eq.s32.totalorder %s19, 1
      %p115 = por %p113, %p114
      %p117 = scmp.ne.s32.totalorder %s100, %s116
      %p118 = scmp.eq.s32.totalorder %s19, 0
      %p119 = por %p117, %p118
      %p120 = scmp.le.s32.totalorder 1, %s13
      %p121 = scmp.lt.s32.totalorder %s13, 3
      %p122 = pnand %p120, %p121
      %p123 = pneg %p122
      // Predicated region
      $region9: #{tpu_custom_call.1} parent=5 // pred_check
        _
      $region10: #{tpu_custom_call.1} parent=5 // pred_check_branch
        %125 = sbr.rel (%p122) target = $region12
      $region11: #{tpu_custom_call.1} parent=5 // pred_region
        %s126 = ssub.s32 %s13, 1
        // Predicated region
        $region13: #{tpu_custom_call.1} parent=11 // pred_check
          %p127 = pneg %p60
        $region14: #{tpu_custom_call.1} parent=11 // pred_check_branch
          %129 = sbr.rel (%p127) target = $region16
        $region15: #{tpu_custom_call.1} parent=11 // pred_region
          %s131 = ssub.s32 2048, 2048
          %132 = vsyncadd [#allocation3], %s131
          %s133 = sshll.u32 [#allocation2], 4
          %s134 = int_to_ptr.vmem [resolvable:$true] %s133
          %139 = dma.hbm_to_vmem [thread:$0]  %s1, 2048, %s134, [#allocation3], 128, 128, 8
        $region16: #{tpu_custom_call.1} parent=11 // pred_fallthru
          _
      $region12: #{tpu_custom_call.1} parent=5 // pred_fallthru
        _
      %p140 = scmp.lt.s32.totalorder %s13, 2
      // Predicated region
      $region17: #{tpu_custom_call.1} parent=5 // pred_check
        %p141 = pneg %p140
      $region18: #{tpu_custom_call.1} parent=5 // pred_check_branch
        %143 = sbr.rel (%p141) target = $region20
      $region19: #{tpu_custom_call.1} parent=5 // pred_region
        // Predicated region
        $region21: #{tpu_custom_call.1} parent=19 // pred_check
          %p144 = pneg %p33
        $region22: #{tpu_custom_call.1} parent=19 // pred_check_branch
          %146 = sbr.rel (%p144) target = $region24
        $region23: #{tpu_custom_call.1} parent=19 // pred_region
          %s147 = smul.u32 32, %s13
          %p148 = scmp.lt.s32.totalorder %s147, 63
          %s149 = scalar_select %p148, %s147, 63
          %s150 = smul.addr %s149, 8
          %s151 = scalar_lea.vmem %s0, %s150
          %s152 = smul.u32 32, %s13
        $region24: #{tpu_custom_call.1} parent=19 // pred_fallthru
          _
        // Predicated region
        $region25: #{tpu_custom_call.1} parent=19 // pred_check
          %p153 = pneg %p80
        $region26: #{tpu_custom_call.1} parent=19 // pred_check_branch
          %155 = sbr.rel (%p153) target = $region28
        $region27: #{tpu_custom_call.1} parent=19 // pred_region
          %s156 = smul.u32 32, %s13
          %p157 = scmp.lt.s32.totalorder %s156, 63
          %s158 = scalar_select %p157, %s156, 63
          %s159 = smul.addr %s158, 8
          %s160 = scalar_lea.vmem %s2, %s159
          %s161 = smul.u32 32, %s13
        $region28: #{tpu_custom_call.1} parent=19 // pred_fallthru
          _
      $region20: #{tpu_custom_call.1} parent=5 // pred_fallthru
        _
      %p162 = scmp.le.s32.totalorder 1, %s13
      %p163 = scmp.lt.s32.totalorder %s13, 3
      %p164 = pnand %p162, %p163
      %p165 = pneg %p164
      // Predicated region
      $region29: #{tpu_custom_call.1} parent=5 // pred_check
        _
      $region30: #{tpu_custom_call.1} parent=5 // pred_check_branch
        %167 = sbr.rel (%p164) target = $region32
      $region31: #{tpu_custom_call.1} parent=5 // pred_region
        %s168 = ssub.s32 %s13, 1
        // Predicated region
        $region33: #{tpu_custom_call.1} parent=31 // pred_check
          %p169 = pneg %p60
        $region34: #{tpu_custom_call.1} parent=31 // pred_check_branch
          %171 = sbr.rel (%p169) target = $region36
        $region35: #{tpu_custom_call.1} parent=31 // pred_region
          %172 = dma.done [#allocation3], 2048
        $region36: #{tpu_custom_call.1} parent=31 // pred_fallthru
          _
        %s173 = smul.u32 32, %s18
        %p174 = scmp.lt.s32.totalorder %s173, 63
        %s175 = scalar_select %p174, %s173, 63
        %s176 = smul.addr %s175, 8
        %s177 = scalar_lea.vmem %s0, %s176
        %p178 = pneg %p39
        %p179 = pneg %p36
        %p180 = pneg %p60
        %p181 = pneg %p57
        %s182 = smul.u32 32, %s18
        %p183 = scmp.lt.s32.totalorder %s182, 63
        %s184 = scalar_select %p183, %s182, 63
        %s185 = smul.addr %s184, 8
        %s186 = scalar_lea.vmem %s2, %s185
        %p187 = pneg %p86
        %p188 = pneg %p83
        %p189 = pneg %p112
        %p190 = pneg %p109
        %s191 = sand.u32 %s99, 1
        %s192 = scalar_lea.sflag [#allocation4], %s191
        %s193 = sand.u32 %s99, 1
        %s194 = smul.addr %s193, 128
        %s195 = scalar_lea.vmem [#allocation5], %s194
        %s196 = smul.u32 32, %s18
        %p197 = scmp.lt.s32.totalorder %s196, 63
        %s198 = scalar_select %p197, %s196, 63
        %s199 = smul.addr %s198, 8
        %s200 = scalar_lea.vmem %s0, %s199
        %s201 = smul.u32 32, %s18
        %s202 = smul.u32 32, %s18
        %p203 = scmp.lt.s32.totalorder %s202, 63
        %s204 = scalar_select %p203, %s202, 63
        %s205 = smul.addr %s204, 8
        %s206 = scalar_lea.vmem %s2, %s205
        %s207 = smul.u32 32, %s18
        %s208 = smul.u32 32, %s18
        %v209 = vld [vmem:[%s200] sm:$0xff]
        %v210 = vld [vmem:[%s200 + $0x8] sm:$0xff]
        %v211 = vld [vmem:[%s200 + $0x10] sm:$0xff]
        %v212 = vld [vmem:[%s200 + $0x18] sm:$0xff]
        %v213 = vld [vmem:[%s200 + $0x20] sm:$0xff]
        %v214 = vld [vmem:[%s200 + $0x28] sm:$0xff]
        %v215 = vld [vmem:[%s200 + $0x30] sm:$0xff]
        %v216 = vld [vmem:[%s200 + $0x38] sm:$0xff]
        %v217 = vld [vmem:[%s200 + $0x40] sm:$0xff]
        %v218 = vld [vmem:[%s200 + $0x48] sm:$0xff]
        %v219 = vld [vmem:[%s200 + $0x50] sm:$0xff]
        %v220 = vld [vmem:[%s200 + $0x58] sm:$0xff]
        %v221 = vld [vmem:[%s200 + $0x60] sm:$0xff]
        %v222 = vld [vmem:[%s200 + $0x68] sm:$0xff]
        %v223 = vld [vmem:[%s200 + $0x70] sm:$0xff]
        %v224 = vld [vmem:[%s200 + $0x78] sm:$0xff]
        %v225 = vld [vmem:[%s200 + $0x80] sm:$0xff]
        %v226 = vld [vmem:[%s200 + $0x88] sm:$0xff]
        %v227 = vld [vmem:[%s200 + $0x90] sm:$0xff]
        %v228 = vld [vmem:[%s200 + $0x98] sm:$0xff]
        %v229 = vld [vmem:[%s200 + $0xa0] sm:$0xff]
        %v230 = vld [vmem:[%s200 + $0xa8] sm:$0xff]
        %v231 = vld [vmem:[%s200 + $0xb0] sm:$0xff]
        %v232 = vld [vmem:[%s200 + $0xb8] sm:$0xff]
        %v233 = vld [vmem:[%s200 + $0xc0] sm:$0xff]
        %v234 = vld [vmem:[%s200 + $0xc8] sm:$0xff]
        %v235 = vld [vmem:[%s200 + $0xd0] sm:$0xff]
        %v236 = vld [vmem:[%s200 + $0xd8] sm:$0xff]
        %v237 = vld [vmem:[%s200 + $0xe0] sm:$0xff]
        %v238 = vld [vmem:[%s200 + $0xe8] sm:$0xff]
        %v239 = vld [vmem:[%s200 + $0xf0] sm:$0xff]
        %v240 = vld [vmem:[%s200 + $0xf8] sm:$0xff]
        %v241 = vld [vmem:[#allocation2] sm:$0xff]
        %v242 = vld [vmem:[#allocation2 + $0x8] sm:$0xff]
        %v243 = vld [vmem:[#allocation2 + $0x10] sm:$0xff]
        %v244 = vld [vmem:[#allocation2 + $0x18] sm:$0xff]
        %v245 = vld [vmem:[#allocation2 + $0x20] sm:$0xff]
        %v246 = vld [vmem:[#allocation2 + $0x28] sm:$0xff]
        %v247 = vld [vmem:[#allocation2 + $0x30] sm:$0xff]
        %v248 = vld [vmem:[#allocation2 + $0x38] sm:$0xff]
        %v249 = vld [vmem:[#allocation2 + $0x40] sm:$0xff]
        %v250 = vld [vmem:[#allocation2 + $0x48] sm:$0xff]
        %v251 = vld [vmem:[#allocation2 + $0x50] sm:$0xff]
        %v252 = vld [vmem:[#allocation2 + $0x58] sm:$0xff]
        %v253 = vld [vmem:[#allocation2 + $0x60] sm:$0xff]
        %v254 = vld [vmem:[#allocation2 + $0x68] sm:$0xff]
        %v255 = vld [vmem:[#allocation2 + $0x70] sm:$0xff]
        %v256 = vld [vmem:[#allocation2 + $0x78] sm:$0xff]
        %257 = vmatprep.subr.mxu0 0.0
        %258 = vmatpush1.msra.mxu0 %v241
        %259 = vmatprep.subr.mxu0 0.0
        %260 = vmatpush1.msra.mxu0 %v242
        %261 = vmatprep.subr.mxu0 0.0
        %262 = vmatpush1.msra.mxu0 %v243
        %263 = vmatprep.subr.mxu0 0.0
        %264 = vmatpush1.msra.mxu0 %v244
        %265 = vmatprep.subr.mxu0 0.0
        %266 = vmatpush1.msra.mxu0 %v245
        %267 = vmatprep.subr.mxu0 0.0
        %268 = vmatpush1.msra.mxu0 %v246
        %269 = vmatprep.subr.mxu0 0.0
        %270 = vmatpush1.msra.mxu0 %v247
        %271 = vmatprep.subr.mxu0 0.0
        %272 = vmatpush1.msra.mxu0 %v248
        %273 = vmatprep.subr.mxu0 0.0
        %274 = vmatpush1.msra.mxu0 %v249
        %275 = vmatprep.subr.mxu0 0.0
        %276 = vmatpush1.msra.mxu0 %v250
        %277 = vmatprep.subr.mxu0 0.0
        %278 = vmatpush1.msra.mxu0 %v251
        %279 = vmatprep.subr.mxu0 0.0
        %280 = vmatpush1.msra.mxu0 %v252
        %281 = vmatprep.subr.mxu0 0.0
        %282 = vmatpush1.msra.mxu0 %v253
        %283 = vmatprep.subr.mxu0 0.0
        %284 = vmatpush1.msra.mxu0 %v254
        %285 = vmatprep.subr.mxu0 0.0
        %286 = vmatpush1.msra.mxu0 %v255
        %287 = vmatprep.subr.mxu0 0.0
        %288 = vmatpush1.msra.mxu0 %v256
        %289 = vmatprep.subr.mxu0 0.0
        %290 = vmatpush1.msra.mxu0 0.0
        %291 = vmatprep.subr.mxu0 0.0
        %292 = vmatpush1.msra.mxu0 0.0
        %293 = vmatprep.subr.mxu0 0.0
        %294 = vmatpush1.msra.mxu0 0.0
        %295 = vmatprep.subr.mxu0 0.0
        %296 = vmatpush1.msra.mxu0 0.0
        %297 = vmatprep.subr.mxu0 0.0
        %298 = vmatpush1.msra.mxu0 0.0
        %299 = vmatprep.subr.mxu0 0.0
        %300 = vmatpush1.msra.mxu0 0.0
        %301 = vmatprep.subr.mxu0 0.0
        %302 = vmatpush1.msra.mxu0 0.0
        %303 = vmatprep.subr.mxu0 0.0
        %304 = vmatpush1.msra.mxu0 0.0
        %305 = vmatprep.subr.mxu0 0.0
        %306 = vmatpush1.msra.mxu0 0.0
        %307 = vmatprep.subr.mxu0 0.0
        %308 = vmatpush1.msra.mxu0 0.0
        %309 = vmatprep.subr.mxu0 0.0
        %310 = vmatpush1.msra.mxu0 0.0
        %311 = vmatprep.subr.mxu0 0.0
        %312 = vmatpush1.msra.mxu0 0.0
        %313 = vmatprep.subr.mxu0 0.0
        %314 = vmatpush1.msra.mxu0 0.0
        %315 = vmatprep.subr.mxu0 0.0
        %316 = vmatpush1.msra.mxu0 0.0
        %317 = vmatprep.subr.mxu0 0.0
        %318 = vmatpush1.msra.mxu0 0.0
        %319 = vmatprep.subr.mxu0 0.0
        %320 = vmatpush1.msra.mxu0 0.0
        %321 = vmatprep.mubr.f32.mxu0 0.0
        %322 = vmatmul.mubr.f32.gmra.mrb[0].mxu0 %v209
        %v323 = vpop.f32.mrb[0].mxu0
        %v324 = vadd.f32 0.0, %v323
        %v325 = vpop.f32.mrb[0].mxu0
        %326 = vmatprep.mubr.f32.mxu0 0.0
        %327 = vmatmul.mubr.f32.gmra.mrb[0].mxu0 %v210
        %v328 = vpop.f32.mrb[0].mxu0
        %v329 = vadd.f32 0.0, %v328
        %v330 = vpop.f32.mrb[0].mxu0
        %331 = vmatprep.mubr.f32.mxu0 0.0
        %332 = vmatmul.mubr.f32.gmra.mrb[0].mxu0 %v211
        %v333 = vpop.f32.mrb[0].mxu0
        %v334 = vadd.f32 0.0, %v333
        %v335 = vpop.f32.mrb[0].mxu0
        %336 = vmatprep.mubr.f32.mxu0 0.0
        %337 = vmatmul.mubr.f32.gmra.mrb[0].mxu0 %v212
        %v338 = vpop.f32.mrb[0].mxu0
        %v339 = vadd.f32 0.0, %v338
        %v340 = vpop.f32.mrb[0].mxu0
        %341 = vmatprep.mubr.f32.mxu0 0.0
        %342 = vmatmul.mubr.f32.gmra.mrb[0].mxu0 %v213
        %v343 = vpop.f32.mrb[0].mxu0
        %v344 = vadd.f32 0.0, %v343
        %v345 = vpop.f32.mrb[0].mxu0
        %346 = vmatprep.mubr.f32.mxu0 0.0
        %347 = vmatmul.mubr.f32.gmra.mrb[0].mxu0 %v214
        %v348 = vpop.f32.mrb[0].mxu0
        %v349 = vadd.f32 0.0, %v348
        %v350 = vpop.f32.mrb[0].mxu0
        %351 = vmatprep.mubr.f32.mxu0 0.0
        %352 = vmatmul.mubr.f32.gmra.mrb[0].mxu0 %v215
        %v353 = vpop.f32.mrb[0].mxu0
        %v354 = vadd.f32 0.0, %v353
        %v355 = vpop.f32.mrb[0].mxu0
        %356 = vmatprep.mubr.f32.mxu0 0.0
        %357 = vmatmul.mubr.f32.gmra.mrb[0].mxu0 %v216
        %v358 = vpop.f32.mrb[0].mxu0
        %v359 = vadd.f32 0.0, %v358
        %v360 = vpop.f32.mrb[0].mxu0
        %361 = vmatprep.mubr.f32.mxu0 0.0
        %362 = vmatmul.mubr.f32.gmra.mrb[0].mxu0 %v217
        %v363 = vpop.f32.mrb[0].mxu0
        %v364 = vadd.f32 0.0, %v363
        %v365 = vpop.f32.mrb[0].mxu0
        %366 = vmatprep.mubr.f32.mxu0 0.0
        %367 = vmatmul.mubr.f32.gmra.mrb[0].mxu0 %v218
        %v368 = vpop.f32.mrb[0].mxu0
        %v369 = vadd.f32 0.0, %v368
        %v370 = vpop.f32.mrb[0].mxu0
        %371 = vmatprep.mubr.f32.mxu0 0.0
        %372 = vmatmul.mubr.f32.gmra.mrb[0].mxu0 %v219
        %v373 = vpop.f32.mrb[0].mxu0
        %v374 = vadd.f32 0.0, %v373
        %v375 = vpop.f32.mrb[0].mxu0
        %376 = vmatprep.mubr.f32.mxu0 0.0
        %377 = vmatmul.mubr.f32.gmra.mrb[0].mxu0 %v220
        %v378 = vpop.f32.mrb[0].mxu0
        %v379 = vadd.f32 0.0, %v378
        %v380 = vpop.f32.mrb[0].mxu0
        %381 = vmatprep.mubr.f32.mxu0 0.0
        %382 = vmatmul.mubr.f32.gmra.mrb[0].mxu0 %v221
        %v383 = vpop.f32.mrb[0].mxu0
        %v384 = vadd.f32 0.0, %v383
        %v385 = vpop.f32.mrb[0].mxu0
        %386 = vmatprep.mubr.f32.mxu0 0.0
        %387 = vmatmul.mubr.f32.gmra.mrb[0].mxu0 %v222
        %v388 = vpop.f32.mrb[0].mxu0
        %v389 = vadd.f32 0.0, %v388
        %v390 = vpop.f32.mrb[0].mxu0
        %391 = vmatprep.mubr.f32.mxu0 0.0
        %392 = vmatmul.mubr.f32.gmra.mrb[0].mxu0 %v223
        %v393 = vpop.f32.mrb[0].mxu0
        %v394 = vadd.f32 0.0, %v393
        %v395 = vpop.f32.mrb[0].mxu0
        %396 = vmatprep.mubr.f32.mxu0 0.0
        %397 = vmatmul.mubr.f32.gmra.mrb[0].mxu0 %v224
        %v398 = vpop.f32.mrb[0].mxu0
        %v399 = vadd.f32 0.0, %v398
        %v400 = vpop.f32.mrb[0].mxu0
        %401 = vmatprep.mubr.f32.mxu0 0.0
        %402 = vmatmul.mubr.f32.gmra.mrb[0].mxu0 %v225
        %v403 = vpop.f32.mrb[0].mxu0
        %v404 = vadd.f32 0.0, %v403
        %v405 = vpop.f32.mrb[0].mxu0
        %406 = vmatprep.mubr.f32.mxu0 0.0
        %407 = vmatmul.mubr.f32.gmra.mrb[0].mxu0 %v226
        %v408 = vpop.f32.mrb[0].mxu0
        %v409 = vadd.f32 0.0, %v408
        %v410 = vpop.f32.mrb[0].mxu0
        %411 = vmatprep.mubr.f32.mxu0 0.0
        %412 = vmatmul.mubr.f32.gmra.mrb[0].mxu0 %v227
        %v413 = vpop.f32.mrb[0].mxu0
        %v414 = vadd.f32 0.0, %v413
        %v415 = vpop.f32.mrb[0].mxu0
        %416 = vmatprep.mubr.f32.mxu0 0.0
        %417 = vmatmul.mubr.f32.gmra.mrb[0].mxu0 %v228
        %v418 = vpop.f32.mrb[0].mxu0
        %v419 = vadd.f32 0.0, %v418
        %v420 = vpop.f32.mrb[0].mxu0
        %421 = vmatprep.mubr.f32.mxu0 0.0
        %422 = vmatmul.mubr.f32.gmra.mrb[0].mxu0 %v229
        %v423 = vpop.f32.mrb[0].mxu0
        %v424 = vadd.f32 0.0, %v423
        %v425 = vpop.f32.mrb[0].mxu0
        %426 = vmatprep.mubr.f32.mxu0 0.0
        %427 = vmatmul.mubr.f32.gmra.mrb[0].mxu0 %v230
        %v428 = vpop.f32.mrb[0].mxu0
        %v429 = vadd.f32 0.0, %v428
        %v430 = vpop.f32.mrb[0].mxu0
        %431 = vmatprep.mubr.f32.mxu0 0.0
        %432 = vmatmul.mubr.f32.gmra.mrb[0].mxu0 %v231
        %v433 = vpop.f32.mrb[0].mxu0
        %v434 = vadd.f32 0.0, %v433
        %v435 = vpop.f32.mrb[0].mxu0
        %436 = vmatprep.mubr.f32.mxu0 0.0
        %437 = vmatmul.mubr.f32.gmra.mrb[0].mxu0 %v232
        %v438 = vpop.f32.mrb[0].mxu0
        %v439 = vadd.f32 0.0, %v438
        %v440 = vpop.f32.mrb[0].mxu0
        %441 = vmatprep.mubr.f32.mxu0 0.0
        %442 = vmatmul.mubr.f32.gmra.mrb[0].mxu0 %v233
        %v443 = vpop.f32.mrb[0].mxu0
        %v444 = vadd.f32 0.0, %v443
        %v445 = vpop.f32.mrb[0].mxu0
        %446 = vmatprep.mubr.f32.mxu0 0.0
        %447 = vmatmul.mubr.f32.gmra.mrb[0].mxu0 %v234
        %v448 = vpop.f32.mrb[0].mxu0
        %v449 = vadd.f32 0.0, %v448
        %v450 = vpop.f32.mrb[0].mxu0
        %451 = vmatprep.mubr.f32.mxu0 0.0
        %452 = vmatmul.mubr.f32.gmra.mrb[0].mxu0 %v235
        %v453 = vpop.f32.mrb[0].mxu0
        %v454 = vadd.f32 0.0, %v453
        %v455 = vpop.f32.mrb[0].mxu0
        %456 = vmatprep.mubr.f32.mxu0 0.0
        %457 = vmatmul.mubr.f32.gmra.mrb[0].mxu0 %v236
        %v458 = vpop.f32.mrb[0].mxu0
        %v459 = vadd.f32 0.0, %v458
        %v460 = vpop.f32.mrb[0].mxu0
        %461 = vmatprep.mubr.f32.mxu0 0.0
        %462 = vmatmul.mubr.f32.gmra.mrb[0].mxu0 %v237
        %v463 = vpop.f32.mrb[0].mxu0
        %v464 = vadd.f32 0.0, %v463
        %v465 = vpop.f32.mrb[0].mxu0
        %466 = vmatprep.mubr.f32.mxu0 0.0
        %467 = vmatmul.mubr.f32.gmra.mrb[0].mxu0 %v238
        %v468 = vpop.f32.mrb[0].mxu0
        %v469 = vadd.f32 0.0, %v468
        %v470 = vpop.f32.mrb[0].mxu0
        %471 = vmatprep.mubr.f32.mxu0 0.0
        %472 = vmatmul.mubr.f32.gmra.mrb[0].mxu0 %v239
        %v473 = vpop.f32.mrb[0].mxu0
        %v474 = vadd.f32 0.0, %v473
        %v475 = vpop.f32.mrb[0].mxu0
        %476 = vmatprep.mubr.f32.mxu0 0.0
        %477 = vmatmul.mubr.f32.gmra.mrb[0].mxu0 %v240
        %v478 = vpop.f32.mrb[0].mxu0
        %v479 = vadd.f32 0.0, %v478
        %v480 = vpop.f32.mrb[0].mxu0
        %481 = vdwg.mxu0
        %v482 = vld [vmem:[%s206] sm:$0xff]
        %v483 = vld [vmem:[%s206 + $0x8] sm:$0xff]
        %v484 = vld [vmem:[%s206 + $0x10] sm:$0xff]
        %v485 = vld [vmem:[%s206 + $0x18] sm:$0xff]
        %v486 = vld [vmem:[%s206 + $0x20] sm:$0xff]
        %v487 = vld [vmem:[%s206 + $0x28] sm:$0xff]
        %v488 = vld [vmem:[%s206 + $0x30] sm:$0xff]
        %v489 = vld [vmem:[%s206 + $0x38] sm:$0xff]
        %v490 = vld [vmem:[%s206 + $0x40] sm:$0xff]
        %v491 = vld [vmem:[%s206 + $0x48] sm:$0xff]
        %v492 = vld [vmem:[%s206 + $0x50] sm:$0xff]
        %v493 = vld [vmem:[%s206 + $0x58] sm:$0xff]
        %v494 = vld [vmem:[%s206 + $0x60] sm:$0xff]
        %v495 = vld [vmem:[%s206 + $0x68] sm:$0xff]
        %v496 = vld [vmem:[%s206 + $0x70] sm:$0xff]
        %v497 = vld [vmem:[%s206 + $0x78] sm:$0xff]
        %v498 = vld [vmem:[%s206 + $0x80] sm:$0xff]
        %v499 = vld [vmem:[%s206 + $0x88] sm:$0xff]
        %v500 = vld [vmem:[%s206 + $0x90] sm:$0xff]
        %v501 = vld [vmem:[%s206 + $0x98] sm:$0xff]
        %v502 = vld [vmem:[%s206 + $0xa0] sm:$0xff]
        %v503 = vld [vmem:[%s206 + $0xa8] sm:$0xff]
        %v504 = vld [vmem:[%s206 + $0xb0] sm:$0xff]
        %v505 = vld [vmem:[%s206 + $0xb8] sm:$0xff]
        %v506 = vld [vmem:[%s206 + $0xc0] sm:$0xff]
        %v507 = vld [vmem:[%s206 + $0xc8] sm:$0xff]
        %v508 = vld [vmem:[%s206 + $0xd0] sm:$0xff]
        %v509 = vld [vmem:[%s206 + $0xd8] sm:$0xff]
        %v510 = vld [vmem:[%s206 + $0xe0] sm:$0xff]
        %v511 = vld [vmem:[%s206 + $0xe8] sm:$0xff]
        %v512 = vld [vmem:[%s206 + $0xf0] sm:$0xff]
        %v513 = vld [vmem:[%s206 + $0xf8] sm:$0xff]
        %515 = vset.pattern.permute.xlu0 0
        %516 = vperm.xlu0 %515, %v482
        %v517 = vpop.permute.xlu0 %516
        %520 = vset.pattern.permute.xlu0 0
        %521 = vperm.xlu0 %520, %v483
        %v522 = vpop.permute.xlu0 %521
        %525 = vset.pattern.permute.xlu0 0
        %526 = vperm.xlu0 %525, %v484
        %v527 = vpop.permute.xlu0 %526
        %530 = vset.pattern.permute.xlu0 0
        %531 = vperm.xlu0 %530, %v485
        %v532 = vpop.permute.xlu0 %531
        %535 = vset.pattern.permute.xlu0 0
        %536 = vperm.xlu0 %535, %v486
        %v537 = vpop.permute.xlu0 %536
        %540 = vset.pattern.permute.xlu0 0
        %541 = vperm.xlu0 %540, %v487
        %v542 = vpop.permute.xlu0 %541
        %545 = vset.pattern.permute.xlu0 0
        %546 = vperm.xlu0 %545, %v488
        %v547 = vpop.permute.xlu0 %546
        %550 = vset.pattern.permute.xlu0 0
        %551 = vperm.xlu0 %550, %v489
        %v552 = vpop.permute.xlu0 %551
        %555 = vset.pattern.permute.xlu0 0
        %556 = vperm.xlu0 %555, %v490
        %v557 = vpop.permute.xlu0 %556
        %560 = vset.pattern.permute.xlu0 0
        %561 = vperm.xlu0 %560, %v491
        %v562 = vpop.permute.xlu0 %561
        %565 = vset.pattern.permute.xlu0 0
        %566 = vperm.xlu0 %565, %v492
        %v567 = vpop.permute.xlu0 %566
        %570 = vset.pattern.permute.xlu0 0
        %571 = vperm.xlu0 %570, %v493
        %v572 = vpop.permute.xlu0 %571
        %575 = vset.pattern.permute.xlu0 0
        %576 = vperm.xlu0 %575, %v494
        %v577 = vpop.permute.xlu0 %576
        %580 = vset.pattern.permute.xlu0 0
        %581 = vperm.xlu0 %580, %v495
        %v582 = vpop.permute.xlu0 %581
        %585 = vset.pattern.permute.xlu0 0
        %586 = vperm.xlu0 %585, %v496
        %v587 = vpop.permute.xlu0 %586
        %590 = vset.pattern.permute.xlu0 0
        %591 = vperm.xlu0 %590, %v497
        %v592 = vpop.permute.xlu0 %591
        %595 = vset.pattern.permute.xlu0 0
        %596 = vperm.xlu0 %595, %v498
        %v597 = vpop.permute.xlu0 %596
        %600 = vset.pattern.permute.xlu0 0
        %601 = vperm.xlu0 %600, %v499
        %v602 = vpop.permute.xlu0 %601
        %605 = vset.pattern.permute.xlu0 0
        %606 = vperm.xlu0 %605, %v500
        %v607 = vpop.permute.xlu0 %606
        %610 = vset.pattern.permute.xlu0 0
        %611 = vperm.xlu0 %610, %v501
        %v612 = vpop.permute.xlu0 %611
        %615 = vset.pattern.permute.xlu0 0
        %616 = vperm.xlu0 %615, %v502
        %v617 = vpop.permute.xlu0 %616
        %620 = vset.pattern.permute.xlu0 0
        %621 = vperm.xlu0 %620, %v503
        %v622 = vpop.permute.xlu0 %621
        %625 = vset.pattern.permute.xlu0 0
        %626 = vperm.xlu0 %625, %v504
        %v627 = vpop.permute.xlu0 %626
        %630 = vset.pattern.permute.xlu0 0
        %631 = vperm.xlu0 %630, %v505
        %v632 = vpop.permute.xlu0 %631
        %635 = vset.pattern.permute.xlu0 0
        %636 = vperm.xlu0 %635, %v506
        %v637 = vpop.permute.xlu0 %636
        %640 = vset.pattern.permute.xlu0 0
        %641 = vperm.xlu0 %640, %v507
        %v642 = vpop.permute.xlu0 %641
        %645 = vset.pattern.permute.xlu0 0
        %646 = vperm.xlu0 %645, %v508
        %v647 = vpop.permute.xlu0 %646
        %650 = vset.pattern.permute.xlu0 0
        %651 = vperm.xlu0 %650, %v509
        %v652 = vpop.permute.xlu0 %651
        %655 = vset.pattern.permute.xlu0 0
        %656 = vperm.xlu0 %655, %v510
        %v657 = vpop.permute.xlu0 %656
        %660 = vset.pattern.permute.xlu0 0
        %661 = vperm.xlu0 %660, %v511
        %v662 = vpop.permute.xlu0 %661
        %665 = vset.pattern.permute.xlu0 0
        %666 = vperm.xlu0 %665, %v512
        %v667 = vpop.permute.xlu0 %666
        %670 = vset.pattern.permute.xlu0 0
        %671 = vperm.xlu0 %670, %v513
        %v672 = vpop.permute.xlu0 %671
        %v674 = vmul.f32 %v517, %v324
        %v675 = vmul.f32 %v522, %v329
        %v676 = vmul.f32 %v527, %v334
        %v677 = vmul.f32 %v532, %v339
        %v678 = vmul.f32 %v537, %v344
        %v679 = vmul.f32 %v542, %v349
        %v680 = vmul.f32 %v547, %v354
        %v681 = vmul.f32 %v552, %v359
        %v682 = vmul.f32 %v557, %v364
        %v683 = vmul.f32 %v562, %v369
        %v684 = vmul.f32 %v567, %v374
        %v685 = vmul.f32 %v572, %v379
        %v686 = vmul.f32 %v577, %v384
        %v687 = vmul.f32 %v582, %v389
        %v688 = vmul.f32 %v587, %v394
        %v689 = vmul.f32 %v592, %v399
        %v690 = vmul.f32 %v597, %v404
        %v691 = vmul.f32 %v602, %v409
        %v692 = vmul.f32 %v607, %v414
        %v693 = vmul.f32 %v612, %v419
        %v694 = vmul.f32 %v617, %v424
        %v695 = vmul.f32 %v622, %v429
        %v696 = vmul.f32 %v627, %v434
        %v697 = vmul.f32 %v632, %v439
        %v698 = vmul.f32 %v637, %v444
        %v699 = vmul.f32 %v642, %v449
        %v700 = vmul.f32 %v647, %v454
        %v701 = vmul.f32 %v652, %v459
        %v702 = vmul.f32 %v657, %v464
        %v703 = vmul.f32 %v662, %v469
        %v704 = vmul.f32 %v667, %v474
        %v705 = vmul.f32 %v672, %v479
        %v706 = vpack.c.bf16 %v675, %v674
        %v707 = vpack.c.bf16 %v677, %v676
        %v708 = vpack.c.bf16 %v679, %v678
        %v709 = vpack.c.bf16 %v681, %v680
        %v710 = vpack.c.bf16 %v683, %v682
        %v711 = vpack.c.bf16 %v685, %v684
        %v712 = vpack.c.bf16 %v687, %v686
        %v713 = vpack.c.bf16 %v689, %v688
        %v714 = vpack.c.bf16 %v691, %v690
        %v715 = vpack.c.bf16 %v693, %v692
        %v716 = vpack.c.bf16 %v695, %v694
        %v717 = vpack.c.bf16 %v697, %v696
        %v718 = vpack.c.bf16 %v699, %v698
        %v719 = vpack.c.bf16 %v701, %v700
        %v720 = vpack.c.bf16 %v703, %v702
        %v721 = vpack.c.bf16 %v705, %v704
        %v738 = vunpack.c.l.b16 %v706
        %v739 = vunpack.c.h.b16 %v706
        %v740 = vunpack.c.l.b16 %v707
        %v741 = vunpack.c.h.b16 %v707
        %v742 = vunpack.c.l.b16 %v708
        %v743 = vunpack.c.h.b16 %v708
        %v744 = vunpack.c.l.b16 %v709
        %v745 = vunpack.c.h.b16 %v709
        %v746 = vunpack.c.l.b16 %v710
        %v747 = vunpack.c.h.b16 %v710
        %v748 = vunpack.c.l.b16 %v711
        %v749 = vunpack.c.h.b16 %v711
        %v750 = vunpack.c.l.b16 %v712
        %v751 = vunpack.c.h.b16 %v712
        %v752 = vunpack.c.l.b16 %v713
        %v753 = vunpack.c.h.b16 %v713
        %v754 = vunpack.c.l.b16 %v714
        %v755 = vunpack.c.h.b16 %v714
        %v756 = vunpack.c.l.b16 %v715
        %v757 = vunpack.c.h.b16 %v715
        %v758 = vunpack.c.l.b16 %v716
        %v759 = vunpack.c.h.b16 %v716
        %v760 = vunpack.c.l.b16 %v717
        %v761 = vunpack.c.h.b16 %v717
        %v762 = vunpack.c.l.b16 %v718
        %v763 = vunpack.c.h.b16 %v718
        %v764 = vunpack.c.l.b16 %v719
        %v765 = vunpack.c.h.b16 %v719
        %v766 = vunpack.c.l.b16 %v720
        %v767 = vunpack.c.h.b16 %v720
        %v768 = vunpack.c.l.b16 %v721
        %v769 = vunpack.c.h.b16 %v721
        %v770 = vpack.c.b16 %v738, %v738
        %v771 = vpack.c.b16 %v739, %v739
        %v772 = vpack.c.b16 %v740, %v740
        %v773 = vpack.c.b16 %v741, %v741
        %v774 = vpack.c.b16 %v742, %v742
        %v775 = vpack.c.b16 %v743, %v743
        %v776 = vpack.c.b16 %v744, %v744
        %v777 = vpack.c.b16 %v745, %v745
        %v778 = vpack.c.b16 %v746, %v746
        %v779 = vpack.c.b16 %v747, %v747
        %v780 = vpack.c.b16 %v748, %v748
        %v781 = vpack.c.b16 %v749, %v749
        %v782 = vpack.c.b16 %v750, %v750
        %v783 = vpack.c.b16 %v751, %v751
        %v784 = vpack.c.b16 %v752, %v752
        %v785 = vpack.c.b16 %v753, %v753
        %v786 = vpack.c.b16 %v754, %v754
        %v787 = vpack.c.b16 %v755, %v755
        %v788 = vpack.c.b16 %v756, %v756
        %v789 = vpack.c.b16 %v757, %v757
        %v790 = vpack.c.b16 %v758, %v758
        %v791 = vpack.c.b16 %v759, %v759
        %v792 = vpack.c.b16 %v760, %v760
        %v793 = vpack.c.b16 %v761, %v761
        %v794 = vpack.c.b16 %v762, %v762
        %v795 = vpack.c.b16 %v763, %v763
        %v796 = vpack.c.b16 %v764, %v764
        %v797 = vpack.c.b16 %v765, %v765
        %v798 = vpack.c.b16 %v766, %v766
        %v799 = vpack.c.b16 %v767, %v767
        %v800 = vpack.c.b16 %v768, %v768
        %v801 = vpack.c.b16 %v769, %v769
        %834 = vst [vmem:[%s195] sm:$0xf] %v770
        %835 = vst [vmem:[%s195 + $0x4] sm:$0xf] %v771
        %836 = vst [vmem:[%s195 + $0x8] sm:$0xf] %v772
        %837 = vst [vmem:[%s195 + $0xc] sm:$0xf] %v773
        %838 = vst [vmem:[%s195 + $0x10] sm:$0xf] %v774
        %839 = vst [vmem:[%s195 + $0x14] sm:$0xf] %v775
        %840 = vst [vmem:[%s195 + $0x18] sm:$0xf] %v776
        %841 = vst [vmem:[%s195 + $0x1c] sm:$0xf] %v777
        %842 = vst [vmem:[%s195 + $0x20] sm:$0xf] %v778
        %843 = vst [vmem:[%s195 + $0x24] sm:$0xf] %v779
        %844 = vst [vmem:[%s195 + $0x28] sm:$0xf] %v780
        %845 = vst [vmem:[%s195 + $0x2c] sm:$0xf] %v781
        %846 = vst [vmem:[%s195 + $0x30] sm:$0xf] %v782
        %847 = vst [vmem:[%s195 + $0x34] sm:$0xf] %v783
        %848 = vst [vmem:[%s195 + $0x38] sm:$0xf] %v784
        %849 = vst [vmem:[%s195 + $0x3c] sm:$0xf] %v785
        %850 = vst [vmem:[%s195 + $0x40] sm:$0xf] %v786
        %851 = vst [vmem:[%s195 + $0x44] sm:$0xf] %v787
        %852 = vst [vmem:[%s195 + $0x48] sm:$0xf] %v788
        %853 = vst [vmem:[%s195 + $0x4c] sm:$0xf] %v789
        %854 = vst [vmem:[%s195 + $0x50] sm:$0xf] %v790
        %855 = vst [vmem:[%s195 + $0x54] sm:$0xf] %v791
        %856 = vst [vmem:[%s195 + $0x58] sm:$0xf] %v792
        %857 = vst [vmem:[%s195 + $0x5c] sm:$0xf] %v793
        %858 = vst [vmem:[%s195 + $0x60] sm:$0xf] %v794
        %859 = vst [vmem:[%s195 + $0x64] sm:$0xf] %v795
        %860 = vst [vmem:[%s195 + $0x68] sm:$0xf] %v796
        %861 = vst [vmem:[%s195 + $0x6c] sm:$0xf] %v797
        %862 = vst [vmem:[%s195 + $0x70] sm:$0xf] %v798
        %863 = vst [vmem:[%s195 + $0x74] sm:$0xf] %v799
        %864 = vst [vmem:[%s195 + $0x78] sm:$0xf] %v800
        %865 = vst [vmem:[%s195 + $0x7c] sm:$0xf] %v801
        %s866 = sand.u32 %s99, 1
        %s867 = scalar_lea.sflag [#allocation4], %s866
        %s868 = sand.u32 %s99, 1
        %s869 = smul.addr %s868, 128
        %s870 = scalar_lea.vmem [#allocation5], %s869
        // Predicated region
        $region37: #{tpu_custom_call.1} parent=31 // pred_check
          %p871 = pneg %p109
        $region38: #{tpu_custom_call.1} parent=31 // pred_check_branch
          %873 = sbr.rel (%p871) target = $region40
        $region39: #{tpu_custom_call.1} parent=31 // pred_region
          %s874 = smul.u32 32, %s18
          %s876 = ssub.s32 2048, 2048
          %877 = vsyncadd %s867, %s876
          %s878 = smul.addr %s874, 64
          %s879 = scalar_lea.hbm %s3, %s878
          %s880 = sshll.u32 %s870, 4
          %s881 = int_to_ptr.vmem [resolvable:$true] %s880
          %886 = dma.vmem_to_hbm [thread:$0]  %s881, 2048, %s879, %s867, 64, 64, 4
        $region40: #{tpu_custom_call.1} parent=31 // pred_fallthru
          _
      $region32: #{tpu_custom_call.1} parent=5 // pred_fallthru
        _
      %p887 = scmp.le.s32.totalorder 2, %s13
      // Predicated region
      $region41: #{tpu_custom_call.1} parent=5 // pred_check
        %p888 = pneg %p887
      $region42: #{tpu_custom_call.1} parent=5 // pred_check_branch
        %890 = sbr.rel (%p888) target = $region44
      $region43: #{tpu_custom_call.1} parent=5 // pred_region
        %s891 = ssub.s32 %s13, 2
        // Predicated region
        $region45: #{tpu_custom_call.1} parent=43 // pred_check
          %p892 = pneg %p115
        $region46: #{tpu_custom_call.1} parent=43 // pred_check_branch
          %894 = sbr.rel (%p892) target = $region48
        $region47: #{tpu_custom_call.1} parent=43 // pred_region
          %s895 = sand.u32 %s100, 1
          %s896 = scalar_lea.sflag [#allocation4], %s895
          %s897 = sand.u32 %s100, 1
          %s898 = smul.addr %s897, 128
          %s899 = scalar_lea.vmem [#allocation5], %s898
          %900 = dma.done %s896, 2048
        $region48: #{tpu_custom_call.1} parent=43 // pred_fallthru
          _
      $region44: #{tpu_custom_call.1} parent=5 // pred_fallthru
        _
    $region6: #{tpu_custom_call.1} parent=1 // loop_footer
      %s17 = sadd.s32 1, %s13
    $region7: #{tpu_custom_call.1} parent=1 // loop_footer_branch
      %12 = sbr.rel target = $region3
    $region8: #{tpu_custom_call.1} parent=1 // loop_exit
      _
    %901 = vsyncpa [#allocation3], 1
    %s902 = scalar_lea.sflag [#allocation3], 1
    %903 = vsyncpa %s902, 1
    %904 = vsyncpa [#allocation4], 1
    %s905 = scalar_lea.sflag [#allocation4], 1
    %906 = vsyncpa %s905, 1

</llo_original>
